<compile_context>
chip_gen: v6e
topology: v6e:2x2x1
jax: 0.10.0
libtpu: 0.0.40
codegen_flags: <defaults>
</compile_context>

<pallas_src>
from functools import partial

import jax
import jax.numpy as jnp
from jax.experimental import pallas as pl
from jax.experimental.pallas import tpu as pltpu


def _vmem_capacity_bytes():
    """Physical per-core VMEM; conservative fallback if the query fails."""
    try:
        info = pltpu.get_tpu_info()
        for name in ("vmem_capacity_bytes", "vmem_bytes", "vmem_size_bytes"):
            v = getattr(info, name, None)
            if v:
                return int(v)
    except Exception:
        pass
    return 64 << 20  # v7x per-TC size: safe lower bound for current gens


# --------------------- single-pass kernel (whole group resident) -------------

def _gn_fused_kernel(x_ref, w_ref, b_ref, o_ref, *, eps, inv_n):
    # x_ref: (GB, cpg, S) -- GB whole (batch, group) rows, full spatial extent.
    x = x_ref[...].astype(jnp.float32)
    mean = jnp.sum(x, axis=(1, 2), keepdims=True) * inv_n           # (GB,1,1)
    xc = x - mean                                                   # centered
    var = jnp.sum(xc * xc, axis=(1, 2), keepdims=True) * inv_n      # biased var
    scale = jax.lax.rsqrt(var + eps) * w_ref[...].astype(jnp.float32)
    o_ref[...] = (xc * scale + b_ref[...].astype(jnp.float32)).astype(o_ref.dtype)


# --------------------- two-phase path (large spatial) ------------------------

def _gn_stats_kernel(x_ref, w_ref, b_ref, scale_ref, shift_ref,
                     mean_acc, m2_acc, *, eps, inv_n, spatial, ts, cpg):
    j = pl.program_id(1)

    @pl.when(j == 0)
    def _():
        mean_acc[...] = jnp.zeros_like(mean_acc)
        m2_acc[...] = jnp.zeros_like(m2_acc)

    x = x_ref[...].astype(jnp.float32)                     # (GB, cpg, TS)
    # Mask the ragged last spatial tile (OOB block reads are undefined).
    valid = jnp.minimum(spatial - j * ts, ts)              # valid cols this tile
    col = jax.lax.broadcasted_iota(jnp.int32, x.shape, 2)
    mask = col < valid
    x = jnp.where(mask, x, 0.0)

    cnt_new = (valid * cpg).astype(jnp.float32)
    cnt_old = (j * (ts * cpg)).astype(jnp.float32)
    tot = cnt_old + cnt_new

    # Per-tile centered stats + Chan/Welford combine (numerically robust).
    t_sum = jnp.sum(x, axis=(1, 2), keepdims=True)         # (GB,1,1)
    t_mean = t_sum / cnt_new
    xc = jnp.where(mask, x - t_mean, 0.0)
    t_m2 = jnp.sum(xc * xc, axis=(1, 2), keepdims=True)

    delta = t_mean - mean_acc[...]
    mean_acc[...] = mean_acc[...] + delta * (cnt_new / tot)
    m2_acc[...] = m2_acc[...] + t_m2 + delta * delta * (cnt_old * cnt_new / tot)

    @pl.when(j == pl.num_programs(1) - 1)
    def _():
        var = m2_acc[...] * inv_n
        scale = jax.lax.rsqrt(var + eps) * w_ref[...].astype(jnp.float32)
        scale_ref[...] = scale                                       # (GB,cpg,1)
        shift_ref[...] = b_ref[...].astype(jnp.float32) - mean_acc[...] * scale


def _gn_norm_kernel(x_ref, scale_ref, shift_ref, o_ref):
    # Pure load-FMA-store stream.
    o_ref[...] = (x_ref[...].astype(jnp.float32) * scale_ref[...]
                  + shift_ref[...]).astype(o_ref.dtype)


# --------------------------------- wrapper -----------------------------------

def group_norm(x, weight, bias, num_groups, eps=1e-5, *, tile_elem_budget=None):
    """GroupNorm forward. x is (N, C, *spatial); weight/bias are (C,) or None."""
    x_shape = x.shape
    batch, channels = int(x_shape[0]), int(x_shape[1])
    assert channels % num_groups == 0
    cpg = channels // num_groups
    spatial = 1
    for d in x_shape[2:]:
        spatial *= int(d)
    spatial = max(spatial, 1)
    rows = batch * num_groups
    eps = float(eps)
    inv_n = 1.0 / float(cpg * spatial)
    itemsize = jnp.dtype(x.dtype).itemsize

    if weight is None:
        weight = jnp.ones((channels,), dtype=x.dtype)
    if bias is None:
        bias = jnp.zeros((channels,), dtype=x.dtype)

    # Per-(batch,group) affine params, sliceable by BlockSpec.  Tiny in HBM.
    w_r = jnp.tile(weight.reshape(num_groups, cpg), (batch, 1)).reshape(rows, cpg, 1)
    b_r = jnp.tile(bias.reshape(num_groups, cpg), (batch, 1)).reshape(rows, cpg, 1)

    # ---- VMEM / tile budgeting (generation- and dtype-aware) ----
    vmem_cap = _vmem_capacity_bytes()
    vmem_limit = int(min(vmem_cap * 3 // 4, 80 << 20))      # below physical on all gens
    usable = max(vmem_limit - (4 << 20), 4 << 20)           # slack for compiler scratch
    # 2x double-buffered input + 2x double-buffered output + ~3 f32 temps.
    bytes_per_elem = 4 * itemsize + 12
    tile_elems = max(1, min(usable // bytes_per_elem, 2 * 1024 * 1024))
    if tile_elem_budget is not None:
        tile_elems = max(1, int(tile_elem_budget))

    x_r = x.reshape(rows, cpg, spatial)                     # contiguous: free

    if cpg * spatial <= tile_elems:
        # ---- single pass: each grid step holds GB whole groups ----
        gb_cap = max(1, tile_elems // (cpg * spatial))
        min_steps = pl.cdiv(rows, gb_cap)
        steps = max(min_steps, min(rows, 4))    # >=4 steps: pipeline depth + 2 TCs
        if steps % 2 == 1 and steps < rows:
            steps += 1                          # even step count: v7x TC balance
        gb = pl.cdiv(rows, steps)
        grid0 = pl.cdiv(rows, gb)               # ragged last row block is OK

        out = pl.pallas_call(
            partial(_gn_fused_kernel, eps=eps, inv_n=inv_n),
            out_shape=jax.ShapeDtypeStruct((rows, cpg, spatial), x.dtype),
            grid=(grid0,),
            in_specs=[
                pl.BlockSpec((gb, cpg, spatial), lambda i: (i, 0, 0)),
                pl.BlockSpec((gb, cpg, 1), lambda i: (i, 0, 0)),
                pl.BlockSpec((gb, cpg, 1), lambda i: (i, 0, 0)),
            ],
            out_specs=pl.BlockSpec((gb, cpg, spatial), lambda i: (i, 0, 0)),
            compiler_params=pltpu.CompilerParams(
                dimension_semantics=("parallel",),
                vmem_limit_bytes=vmem_limit),
            cost_estimate=pl.CostEstimate(
                flops=int(7 * rows * cpg * spatial),
                transcendentals=int(rows),
                bytes_accessed=int(2 * rows * cpg * spatial * itemsize)),
        )(x_r, w_r, b_r)
    else:
        # ---- two phases: stats across spatial tiles, then normalize ----
        ts = max(128, (tile_elems // cpg) // 128 * 128)
        ts = min(ts, ((spatial + 127) // 128) * 128)
        n_s = pl.cdiv(spatial, ts)                         # ragged tail masked in-kernel
        gb = max(1, tile_elems // (cpg * ts))
        if rows >= 2:
            gb = min(gb, pl.cdiv(rows, 2))                 # keep >=2 parallel row steps
        n_r = pl.cdiv(rows, gb)

        scale, shift = pl.pallas_call(
            partial(_gn_stats_kernel, eps=eps, inv_n=inv_n,
                    spatial=spatial, ts=ts, cpg=cpg),
            out_shape=(jax.ShapeDtypeStruct((rows, cpg, 1), jnp.float32),
                       jax.ShapeDtypeStruct((rows, cpg, 1), jnp.float32)),
            grid=(n_r, n_s),
            in_specs=[
                pl.BlockSpec((gb, cpg, ts), lambda i, j: (i, 0, j)),
                pl.BlockSpec((gb, cpg, 1), lambda i, j: (i, 0, 0)),
                pl.BlockSpec((gb, cpg, 1), lambda i, j: (i, 0, 0)),
            ],
            out_specs=(pl.BlockSpec((gb, cpg, 1), lambda i, j: (i, 0, 0)),
                       pl.BlockSpec((gb, cpg, 1), lambda i, j: (i, 0, 0))),
            scratch_shapes=[pltpu.VMEM((gb, 1, 1), jnp.float32),
                            pltpu.VMEM((gb, 1, 1), jnp.float32)],
            compiler_params=pltpu.CompilerParams(
                dimension_semantics=("parallel", "arbitrary"),
                vmem_limit_bytes=vmem_limit),
            cost_estimate=pl.CostEstimate(
                flops=int(6 * rows * cpg * spatial),
                transcendentals=int(rows),
                bytes_accessed=int(rows * cpg * spatial * itemsize)),
        )(x_r, w_r, b_r)

        out = pl.pallas_call(
            _gn_norm_kernel,
            out_shape=jax.ShapeDtypeStruct((rows, cpg, spatial), x.dtype),
            grid=(n_r, n_s),
            in_specs=[
                pl.BlockSpec((gb, cpg, ts), lambda i, j: (i, 0, j)),
                pl.BlockSpec((gb, cpg, 1), lambda i, j: (i, 0, 0)),
                pl.BlockSpec((gb, cpg, 1), lambda i, j: (i, 0, 0)),
            ],
            out_specs=pl.BlockSpec((gb, cpg, ts), lambda i, j: (i, 0, j)),
            compiler_params=pltpu.CompilerParams(
                dimension_semantics=("parallel", "parallel"),
                vmem_limit_bytes=vmem_limit),
            cost_estimate=pl.CostEstimate(
                flops=int(2 * rows * cpg * spatial),
                transcendentals=0,
                bytes_accessed=int(2 * rows * cpg * spatial * itemsize)),
        )(x_r, scale, shift)

    return out.reshape(x_shape)


def _reference_group_norm(x, weight, bias, num_groups, eps=1e-5):
    """Pure-JAX reference mirroring the PyTorch module."""
    x_shape = x.shape
    b = x_shape[0]
    xr = x.reshape(b, num_groups, -1).astype(jnp.float32)
    mean = jnp.mean(xr, axis=-1, keepdims=True)
    var = jnp.mean((xr - mean) ** 2, axis=-1, keepdims=True)
    xn = (xr - mean) / jnp.sqrt(var + eps)
    xn = xn.reshape(b, x_shape[1], -1)
    xn = xn * weight.reshape(1, -1, 1) + bias.reshape(1, -1, 1)
    return xn.reshape(x_shape).astype(x.dtype)


if __name__ == "__main__":
    key = jax.random.PRNGKey(0)
    k1, k2, k3, k4, k5, k6, k7 = jax.random.split(key, 7)

    # Case 1: module demo config (num_channels=4, num_groups=2, eps=1e-5,
    # affine weight=1 / bias=0), lane-aligned spatial (16*16 = 256).
    x1 = jax.random.normal(k1, (2, 4, 16, 16), dtype=jnp.float32)
    w1 = jnp.ones((4,), jnp.float32)
    b1 = jnp.zeros((4,), jnp.float32)
    o1 = jax.block_until_ready(group_norm(x1, w1, b1, num_groups=2, eps=1e-5))
    r1 = _reference_group_norm(x1, w1, b1, 2, eps=1e-5)
    assert o1.shape == x1.shape
    assert jnp.allclose(o1, r1, atol=3e-5, rtol=1e-5)

    # Case 2: non-128-multiple spatial (12*12 = 144) -> exercises the
    # full-extent (unpadded) spatial block with masked tail stores.
    x2 = jax.random.normal(k2, (2, 8, 12, 12), dtype=jnp.float32)
    w2 = jax.random.normal(k3, (8,), dtype=jnp.float32)
    b2 = jax.random.normal(k4, (8,), dtype=jnp.float32)
    o2 = jax.block_until_ready(group_norm(x2, w2, b2, num_groups=4, eps=1e-5))
    r2 = _reference_group_norm(x2, w2, b2, 4, eps=1e-5)
    assert jnp.allclose(o2, r2, atol=3e-5, rtol=1e-5)

    # Case 3: rows=10 -> ragged last row block (cdiv grid, OOB rows discarded).
    x3 = jax.random.normal(k5, (5, 4, 12, 12), dtype=jnp.float32)
    w3 = jax.random.normal(k6, (4,), dtype=jnp.float32)
    b3 = jax.random.normal(k7, (4,), dtype=jnp.float32)
    o3 = jax.block_until_ready(group_norm(x3, w3, b3, num_groups=2, eps=1e-5))
    r3 = _reference_group_norm(x3, w3, b3, 2, eps=1e-5)
    assert jnp.allclose(o3, r3, atol=3e-5, rtol=1e-5)

    # Case 4: force the two-phase (stats + normalize) path with a tiny tile
    # budget: exercises the Chan/Welford combine and the masked ragged spatial
    # tail (576 cols, ts=512); offset data checks variance robustness.
    x4 = jax.random.normal(k2, (2, 8, 24, 24), dtype=jnp.float32) * 0.1 + 5.0
    o4 = jax.block_until_ready(
        group_norm(x4, w2, b2, num_groups=4, eps=1e-5, tile_elem_budget=1024))
    r4 = _reference_group_norm(x4, w2, b2, 4, eps=1e-5)
    assert jnp.allclose(o4, r4, atol=1e-4, rtol=1e-5)

    print("KERNEL_OK")
</pallas_src>

<mosaic_0001>
module attributes {stable_mosaic.version = 11 : i64} {
  func.func @_gn_fused_kernel(%arg0: i32, %arg1: memref<1x2x256xf32, #tpu.memory_space<vmem>>, %arg2: memref<1x2x1xf32, #tpu.memory_space<vmem>>, %arg3: memref<1x2x1xf32, #tpu.memory_space<vmem>>, %arg4: memref<1x2x256xf32, #tpu.memory_space<vmem>>) attributes {dimension_semantics = [#tpu.dimension_semantics<parallel>], iteration_bounds = array<i64: 4>, scalar_prefetch = 0 : i64, scratch_operands = 0 : i64, tpu.core_type = #tpu.core_type<tc>, window_params = [{transform_indices = @transform_0, window_bounds = array<i64: 1, 2, 256>}, {transform_indices = @transform_1, window_bounds = array<i64: 1, 2, 1>}, {transform_indices = @transform_2, window_bounds = array<i64: 1, 2, 1>}, {transform_indices = @transform_3, window_bounds = array<i64: 1, 2, 256>}]} {
    %c0 = arith.constant 0 : index
    %c0_0 = arith.constant 0 : index
    %c0_1 = arith.constant 0 : index
    %0 = vector.load %arg1[%c0, %c0_0, %c0_1] : memref<1x2x256xf32, #tpu.memory_space<vmem>>, vector<1x2x256xf32>
    %cst = arith.constant dense<0.000000e+00> : vector<1xf32>
    %1 = vector.multi_reduction <add>, %0, %cst [1, 2] : vector<1x2x256xf32> to vector<1xf32>
    %2 = vector.shape_cast %1 : vector<1xf32> to vector<1x1x1xf32>
    %cst_2 = arith.constant 0.001953125 : f32
    %3 = vector.broadcast %cst_2 : f32 to vector<1x1x1xf32>
    %4 = arith.mulf %2, %3 : vector<1x1x1xf32>
    %5 = vector.broadcast %4 : vector<1x1x1xf32> to vector<1x2x256xf32>
    %6 = arith.subf %0, %5 : vector<1x2x256xf32>
    %7 = arith.mulf %6, %6 : vector<1x2x256xf32>
    %cst_3 = arith.constant dense<0.000000e+00> : vector<1xf32>
    %8 = vector.multi_reduction <add>, %7, %cst_3 [1, 2] : vector<1x2x256xf32> to vector<1xf32>
    %9 = vector.shape_cast %8 : vector<1xf32> to vector<1x1x1xf32>
    %cst_4 = arith.constant 0.001953125 : f32
    %10 = vector.broadcast %cst_4 : f32 to vector<1x1x1xf32>
    %11 = arith.mulf %9, %10 : vector<1x1x1xf32>
    %cst_5 = arith.constant 9.99999974E-6 : f32
    %12 = vector.broadcast %cst_5 : f32 to vector<1x1x1xf32>
    %13 = arith.addf %11, %12 : vector<1x1x1xf32>
    %14 = math.rsqrt %13 : vector<1x1x1xf32>
    %c0_6 = arith.constant 0 : index
    %c0_7 = arith.constant 0 : index
    %c0_8 = arith.constant 0 : index
    %15 = vector.load %arg2[%c0_6, %c0_7, %c0_8] : memref<1x2x1xf32, #tpu.memory_space<vmem>>, vector<1x2x1xf32>
    %16 = vector.broadcast %14 : vector<1x1x1xf32> to vector<1x2x1xf32>
    %17 = arith.mulf %16, %15 : vector<1x2x1xf32>
    %18 = vector.broadcast %17 : vector<1x2x1xf32> to vector<1x2x256xf32>
    %19 = arith.mulf %6, %18 : vector<1x2x256xf32>
    %c0_9 = arith.constant 0 : index
    %c0_10 = arith.constant 0 : index
    %c0_11 = arith.constant 0 : index
    %20 = vector.load %arg3[%c0_9, %c0_10, %c0_11] : memref<1x2x1xf32, #tpu.memory_space<vmem>>, vector<1x2x1xf32>
    %21 = vector.broadcast %20 : vector<1x2x1xf32> to vector<1x2x256xf32>
    %22 = arith.addf %19, %21 : vector<1x2x256xf32>
    %c0_12 = arith.constant 0 : index
    %c0_13 = arith.constant 0 : index
    %c0_14 = arith.constant 0 : index
    %23 = vector.load %arg4[%c0_12, %c0_13, %c0_14] : memref<1x2x256xf32, #tpu.memory_space<vmem>>, vector<1x2x256xf32>
    tpu.vector_store %arg4[%c0_12, %c0_13, %c0_14], %22 {strides = array<i32>} : memref<1x2x256xf32, #tpu.memory_space<vmem>>, vector<1x2x256xf32>,
    return
  }
  func.func @transform_0(%arg0: i32) -> (i32, i32, i32) {
    %c0_i32 = arith.constant 0 : i32
    %c0_i32_0 = arith.constant 0 : i32
    %c0_i32_1 = arith.constant 0 : i32
    return %arg0, %c0_i32, %c0_i32_0 : i32, i32, i32
  }
  func.func @transform_1(%arg0: i32) -> (i32, i32, i32) {
    %c0_i32 = arith.constant 0 : i32
    %c0_i32_0 = arith.constant 0 : i32
    %c0_i32_1 = arith.constant 0 : i32
    return %arg0, %c0_i32, %c0_i32_0 : i32, i32, i32
  }
  func.func @transform_2(%arg0: i32) -> (i32, i32, i32) {
    %c0_i32 = arith.constant 0 : i32
    %c0_i32_0 = arith.constant 0 : i32
    %c0_i32_1 = arith.constant 0 : i32
    return %arg0, %c0_i32, %c0_i32_0 : i32, i32, i32
  }
  func.func @transform_3(%arg0: i32) -> (i32, i32, i32) {
    %c0_i32 = arith.constant 0 : i32
    %c0_i32_0 = arith.constant 0 : i32
    %c0_i32_1 = arith.constant 0 : i32
    return %arg0, %c0_i32, %c0_i32_0 : i32, i32, i32
  }
}

</mosaic_0001>

<llo_original>
// kernel: tpu_custom_call.1
$region0: #{tpu_custom_call.1}
  #allocation0 [shape = 'u32[]', space=smem, size = 0x4, offset = 0x4, fixed_abs, tag = 'smem constant byte address 0x4 - core index']
  #allocation1 [shape = 'u32[144,128]{1,0:T(1,128)}', space=vmem, size = 0x12000, scoped, tag = 'internal scratch']
  %s0 = inlined_call_operand.vmem [shape: f32[4,2,256], index: 0, kind: input, shape index: {}]
  %s1 = inlined_call_operand.vmem [shape: f32[4,2,1], index: 1, kind: input, shape index: {}]
  %s2 = inlined_call_operand.vmem [shape: f32[4,2,1], index: 2, kind: input, shape index: {}]
  %s3 = inlined_call_operand.hbm [shape: f32[4,2,256], index: 3, kind: output, shape index: {}]
  %s4 = sld [smem:[#allocation0]]
  $region45: #{tpu_custom_call.1} parent=0
    _
  %s6 = ssub.s32 1, %s4
  %s7 = scalar_select 0, %s6, %s4
  $region1: #{tpu_custom_call.1} parent=0
    #allocation2 [shape = 'u8[4096]{0}', space=vmem, size = 0x1000, scoped, tag = 'output window, operand 0']
    #allocation3 [shape = 's32[2]{0}', space=sflag, size = 0x8, scoped, tag = 'scoped memory for tpu_custom_call.1']
    %8 = vsyncpa [#allocation3], 0
    %s9 = scalar_lea.sflag [#allocation3], 1
    %10 = vsyncpa %s9, 0
    loop: start=0, step=1, limit=6
    $region2: #{tpu_custom_call.1} parent=1 // loop_pre_header
      _
    $region3: #{tpu_custom_call.1} parent=1 // loop_header
      %s12 = sphi 0, %s16
      %p13 = scmp.ge.s32.totalorder %s12, 6
      %s22 = sphi 0, %s24
      %s25 = sphi 0, %s22
      %s26 = sphi 0, %s25
      %s42 = sphi 0, %s26
      %s48 = sphi 0, %s50
      %s51 = sphi 0, %s48
      %s52 = sphi 0, %s51
      %s68 = sphi 0, %s52
      %s74 = sphi 0, %s76
      %s77 = sphi 0, %s74
      %s78 = sphi 0, %s77
      %s94 = sphi 0, %s78
      %s100 = sphi 0, %s102
      %s103 = sphi 0, %s100
      %s104 = sphi 0, %s103
      %s120 = sphi 0, %s104
    $region4: #{tpu_custom_call.1} parent=1 // loop_header_branch
      %15 = sbr.rel (%p13) target = $region8
    $region5: #{tpu_custom_call.1} parent=1 // loop_body
      %s17 = ssub.s32 %s12, 1
      %s18 = ssub.s32 %s12, 2
      %s19 = sadd.s32 %s12, 1
      %s20 = ssub.s32 %s12, %s19
      %p21 = scmp.eq.s32.totalorder %s20, 0
      %s23 = sadd.s32 %s22, 1
      %s24 = scalar_select %p21, %s22, %s23
      %p27 = pneg %p21
      %p28 = scmp.eq.s32.totalorder %s12, 3
      %p29 = por %p27, %p28
      %p30 = scmp.ne.s32.totalorder %s22, %s25
      %p31 = scmp.eq.s32.totalorder %s12, 0
      %p32 = por %p30, %p31
      %p33 = scmp.ne.s32.totalorder %s22, %s25
      %p34 = scmp.eq.s32.totalorder %s17, 3
      %p35 = por %p33, %p34
      %p36 = scmp.ne.s32.totalorder %s25, %s26
      %p37 = scmp.eq.s32.totalorder %s17, 0
      %p38 = por %p36, %p37
      %p39 = scmp.ne.s32.totalorder %s25, %s26
      %p40 = scmp.eq.s32.totalorder %s18, 3
      %p41 = por %p39, %p40
      %p43 = scmp.ne.s32.totalorder %s26, %s42
      %p44 = scmp.eq.s32.totalorder %s18, 0
      %p45 = por %p43, %p44
      %s46 = ssub.s32 %s12, %s19
      %p47 = scmp.eq.s32.totalorder %s46, 0
      %s49 = sadd.s32 %s48, 1
      %s50 = scalar_select %p47, %s48, %s49
      %p53 = pneg %p47
      %p54 = scmp.eq.s32.totalorder %s12, 3
      %p55 = por %p53, %p54
      %p56 = scmp.ne.s32.totalorder %s48, %s51
      %p57 = scmp.eq.s32.totalorder %s12, 0
      %p58 = por %p56, %p57
      %p59 = scmp.ne.s32.totalorder %s48, %s51
      %p60 = scmp.eq.s32.totalorder %s17, 3
      %p61 = por %p59, %p60
      %p62 = scmp.ne.s32.totalorder %s51, %s52
      %p63 = scmp.eq.s32.totalorder %s17, 0
      %p64 = por %p62, %p63
      %p65 = scmp.ne.s32.totalorder %s51, %s52
      %p66 = scmp.eq.s32.totalorder %s18, 3
      %p67 = por %p65, %p66
      %p69 = scmp.ne.s32.totalorder %s52, %s68
      %p70 = scmp.eq.s32.totalorder %s18, 0
      %p71 = por %p69, %p70
      %s72 = ssub.s32 %s12, %s19
      %p73 = scmp.eq.s32.totalorder %s72, 0
      %s75 = sadd.s32 %s74, 1
      %s76 = scalar_select %p73, %s74, %s75
      %p79 = pneg %p73
      %p80 = scmp.eq.s32.totalorder %s12, 3
      %p81 = por %p79, %p80
      %p82 = scmp.ne.s32.totalorder %s74, %s77
      %p83 = scmp.eq.s32.totalorder %s12, 0
      %p84 = por %p82, %p83
      %p85 = scmp.ne.s32.totalorder %s74, %s77
      %p86 = scmp.eq.s32.totalorder %s17, 3
      %p87 = por %p85, %p86
      %p88 = scmp.ne.s32.totalorder %s77, %s78
      %p89 = scmp.eq.s32.totalorder %s17, 0
      %p90 = por %p88, %p89
      %p91 = scmp.ne.s32.totalorder %s77, %s78
      %p92 = scmp.eq.s32.totalorder %s18, 3
      %p93 = por %p91, %p92
      %p95 = scmp.ne.s32.totalorder %s78, %s94
      %p96 = scmp.eq.s32.totalorder %s18, 0
      %p97 = por %p95, %p96
      %s98 = ssub.s32 %s12, %s19
      %p99 = scmp.eq.s32.totalorder %s98, 0
      %s101 = sadd.s32 %s100, 1
      %s102 = scalar_select %p99, %s100, %s101
      %p105 = pneg %p99
      %p106 = scmp.eq.s32.totalorder %s12, 3
      %p107 = por %p105, %p106
      %p108 = scmp.ne.s32.totalorder %s100, %s103
      %p109 = scmp.eq.s32.totalorder %s12, 0
      %p110 = por %p108, %p109
      %p111 = scmp.ne.s32.totalorder %s100, %s103
      %p112 = scmp.eq.s32.totalorder %s17, 3
      %p113 = por %p111, %p112
      %p114 = scmp.ne.s32.totalorder %s103, %s104
      %p115 = scmp.eq.s32.totalorder %s17, 0
      %p116 = por %p114, %p115
      %p117 = scmp.ne.s32.totalorder %s103, %s104
      %p118 = scmp.eq.s32.totalorder %s18, 3
      %p119 = por %p117, %p118
      %p121 = scmp.ne.s32.totalorder %s104, %s120
      %p122 = scmp.eq.s32.totalorder %s18, 0
      %p123 = por %p121, %p122
      %p124 = scmp.le.s32.totalorder 1, %s12
      %p125 = scmp.lt.s32.totalorder %s12, 5
      %p126 = pnand %p124, %p125
      %p127 = pneg %p126
      // Predicated region
      $region9: #{tpu_custom_call.1} parent=5 // pred_check
        _
      $region10: #{tpu_custom_call.1} parent=5 // pred_check_branch
        %129 = sbr.rel (%p126) target = $region12
      $region11: #{tpu_custom_call.1} parent=5 // pred_region
        %s130 = ssub.s32 %s12, 1
      $region12: #{tpu_custom_call.1} parent=5 // pred_fallthru
        _
      %p131 = scmp.lt.s32.totalorder %s12, 4
      // Predicated region
      $region13: #{tpu_custom_call.1} parent=5 // pred_check
        %p132 = pneg %p131
      $region14: #{tpu_custom_call.1} parent=5 // pred_check_branch
        %134 = sbr.rel (%p132) target = $region16
      $region15: #{tpu_custom_call.1} parent=5 // pred_region
        // Predicated region
        $region17: #{tpu_custom_call.1} parent=15 // pred_check
          %p135 = pneg %p32
        $region18: #{tpu_custom_call.1} parent=15 // pred_check_branch
          %137 = sbr.rel (%p135) target = $region20
        $region19: #{tpu_custom_call.1} parent=15 // pred_region
          %p138 = scmp.lt.s32.totalorder %s12, 3
          %s139 = scalar_select %p138, %s12, 3
          %s140 = smul.addr %s139, 2
          %s141 = smul.addr %s140, 2
          %s142 = scalar_lea.vmem %s0, %s141
        $region20: #{tpu_custom_call.1} parent=15 // pred_fallthru
          _
        // Predicated region
        $region21: #{tpu_custom_call.1} parent=15 // pred_check
          %p143 = pneg %p58
        $region22: #{tpu_custom_call.1} parent=15 // pred_check_branch
          %145 = sbr.rel (%p143) target = $region24
        $region23: #{tpu_custom_call.1} parent=15 // pred_region
          %p146 = scmp.lt.s32.totalorder %s12, 3
          %s147 = scalar_select %p146, %s12, 3
          %s148 = smul.addr %s147, 2
          %s149 = scalar_lea.vmem %s1, %s148
        $region24: #{tpu_custom_call.1} parent=15 // pred_fallthru
          _
        // Predicated region
        $region25: #{tpu_custom_call.1} parent=15 // pred_check
          %p150 = pneg %p84
        $region26: #{tpu_custom_call.1} parent=15 // pred_check_branch
          %152 = sbr.rel (%p150) target = $region28
        $region27: #{tpu_custom_call.1} parent=15 // pred_region
          %p153 = scmp.lt.s32.totalorder %s12, 3
          %s154 = scalar_select %p153, %s12, 3
          %s155 = smul.addr %s154, 2
          %s156 = scalar_lea.vmem %s2, %s155
        $region28: #{tpu_custom_call.1} parent=15 // pred_fallthru
          _
      $region16: #{tpu_custom_call.1} parent=5 // pred_fallthru
        _
      %p157 = scmp.le.s32.totalorder 1, %s12
      %p158 = scmp.lt.s32.totalorder %s12, 5
      %p159 = pnand %p157, %p158
      %p160 = pneg %p159
      // Predicated region
      $region29: #{tpu_custom_call.1} parent=5 // pred_check
        _
      $region30: #{tpu_custom_call.1} parent=5 // pred_check_branch
        %162 = sbr.rel (%p159) target = $region32
      $region31: #{tpu_custom_call.1} parent=5 // pred_region
        %s163 = ssub.s32 %s12, 1
        %p164 = scmp.lt.s32.totalorder %s17, 3
        %s165 = scalar_select %p164, %s17, 3
        %s166 = smul.addr %s165, 2
        %s167 = smul.addr %s166, 2
        %s168 = scalar_lea.vmem %s0, %s167
        %p169 = pneg %p38
        %p170 = pneg %p35
        %p171 = scmp.lt.s32.totalorder %s17, 3
        %s172 = scalar_select %p171, %s17, 3
        %s173 = smul.addr %s172, 2
        %s174 = scalar_lea.vmem %s1, %s173
        %p175 = pneg %p64
        %p176 = pneg %p61
        %p177 = scmp.lt.s32.totalorder %s17, 3
        %s178 = scalar_select %p177, %s17, 3
        %s179 = smul.addr %s178, 2
        %s180 = scalar_lea.vmem %s2, %s179
        %p181 = pneg %p90
        %p182 = pneg %p87
        %p183 = pneg %p116
        %p184 = pneg %p113
        %s185 = sand.u32 %s103, 1
        %s186 = scalar_lea.sflag [#allocation3], %s185
        %s187 = sand.u32 %s103, 1
        %s188 = smul.addr %s187, 4
        %s189 = scalar_lea.vmem [#allocation2], %s188
        %p190 = scmp.lt.s32.totalorder %s17, 3
        %s191 = scalar_select %p190, %s17, 3
        %s192 = smul.addr %s191, 2
        %s193 = smul.addr %s192, 2
        %s194 = scalar_lea.vmem %s0, %s193
        %p195 = scmp.lt.s32.totalorder %s17, 3
        %s196 = scalar_select %p195, %s17, 3
        %s197 = smul.addr %s196, 2
        %s198 = scalar_lea.vmem %s1, %s197
        %p199 = scmp.lt.s32.totalorder %s17, 3
        %s200 = scalar_select %p199, %s17, 3
        %s201 = smul.addr %s200, 2
        %s202 = scalar_lea.vmem %s2, %s201
        %v203 = vld [vmem:[%s194] sm:$0xf]
        %v206 = vunpack.c.l.s4 1983009808
        %v207 = vunpack.c.0.s8 %v206
        %v208 = vlaneseq
        %v209 = vshrl.u32 %v208, 7
        %v210 = vsub.s32 %v207, %v209
        %v211 = vrot.slane %v203, %v210
        %v212 = vcombine.high %v211, %v211
        %vm215 = vcmask 1041408
        %v216 = vsel %vm215, %v211, 0.0
        %v217 = vsel %vm215, %v212, 0.0
        %v218 = vadd.f32 %v216, %v217
        %219 = vadd.xlane.f32.xlu0 %v218
        %v220 = vpop.xlane.xlu0 %219
        %v221 = vrot.slane %v220, 4
        %v222 = vadd.f32 %v220, %v221
        %v223 = vrot.slane %v222, 2
        %v224 = vadd.f32 %v222, %v223
        %v225 = vrot.slane %v224, 1
        %v226 = vadd.f32 %v224, %v225
        %v227 = vmul.f32 %v226, 0.001953125
        %v228 = vsub.f32 %v203, %v227
        %v229 = vmul.f32 %v228, %v228
        %v232 = vunpack.c.l.s4 1983009808
        %v233 = vunpack.c.0.s8 %v232
        %v234 = vlaneseq
        %v235 = vshrl.u32 %v234, 7
        %v236 = vsub.s32 %v233, %v235
        %v237 = vrot.slane %v229, %v236
        %v238 = vcombine.high %v237, %v237
        %v241 = vsel %vm215, %v237, 0.0
        %v242 = vsel %vm215, %v238, 0.0
        %v243 = vadd.f32 %v241, %v242
        %244 = vadd.xlane.f32.xlu0 %v243
        %v245 = vpop.xlane.xlu0 %244
        %v246 = vrot.slane %v245, 4
        %v247 = vadd.f32 %v245, %v246
        %v248 = vrot.slane %v247, 2
        %v249 = vadd.f32 %v247, %v248
        %v250 = vrot.slane %v249, 1
        %v251 = vadd.f32 %v249, %v250
        %v252 = vmul.f32 %v251, 0.001953125
        %v253 = vadd.f32 %v252, 1e-05
        %v254 = vrsqrt.pop %v253
        %v255 = vld [vmem:[%s198] sm:$0x3]
        %v256 = vmul.f32 %v254, %v255
        %258 = vset.pattern.permute.xlu0 0
        %259 = vperm.xlu0 %258, %v256
        %v260 = vpop.permute.xlu0 %259
        %v262 = vunpack.c.l.s4 269488144
        %v263 = vunpack.c.0.s8 %v262
        %v264 = vlaneseq
        %v265 = vshrl.u32 %v264, 7
        %v266 = vsub.s32 %v263, %v265
        %v267 = vrot.slane %v260, %v266
        %v269 = vmul.f32 %v228, %v267
        %v270 = vld [vmem:[%s202] sm:$0x3]
        %272 = vset.pattern.permute.xlu0 0
        %273 = vperm.xlu0 %272, %v270
        %v274 = vpop.permute.xlu0 %273
        %v276 = vunpack.c.l.s4 269488144
        %v277 = vunpack.c.0.s8 %v276
        %v278 = vlaneseq
        %v279 = vshrl.u32 %v278, 7
        %v280 = vsub.s32 %v277, %v279
        %v281 = vrot.slane %v274, %v280
        %v283 = vadd.f32 %v269, %v281
        %284 = vst [vmem:[%s189] sm:$0xf] %v283
        %s285 = sand.u32 %s103, 1
        %s286 = scalar_lea.sflag [#allocation3], %s285
        %s287 = sand.u32 %s103, 1
        %s288 = smul.addr %s287, 4
        %s289 = scalar_lea.vmem [#allocation2], %s288
        // Predicated region
        $region33: #{tpu_custom_call.1} parent=31 // pred_check
          %p290 = pneg %p113
        $region34: #{tpu_custom_call.1} parent=31 // pred_check_branch
          %292 = sbr.rel (%p290) target = $region36
        $region35: #{tpu_custom_call.1} parent=31 // pred_region
          %s294 = ssub.s32 64, 64
          %295 = vsyncadd %s286, %s294
          %s296 = smul.addr %s17, 2
          %s297 = smul.addr %s296, 32
          %s298 = scalar_lea.hbm %s3, %s297
          %s300 = sshll.u32 %s289, 4
          %s301 = int_to_ptr.vmem [resolvable:$true] %s300
          %303 = dma.vmem_to_hbm [thread:$0]  %s301, 64, %s298, %s286
        $region36: #{tpu_custom_call.1} parent=31 // pred_fallthru
          _
      $region32: #{tpu_custom_call.1} parent=5 // pred_fallthru
        _
      %p304 = scmp.le.s32.totalorder 2, %s12
      // Predicated region
      $region37: #{tpu_custom_call.1} parent=5 // pred_check
        %p305 = pneg %p304
      $region38: #{tpu_custom_call.1} parent=5 // pred_check_branch
        %307 = sbr.rel (%p305) target = $region40
      $region39: #{tpu_custom_call.1} parent=5 // pred_region
        %s308 = ssub.s32 %s12, 2
        // Predicated region
        $region41: #{tpu_custom_call.1} parent=39 // pred_check
          %p309 = pneg %p119
        $region42: #{tpu_custom_call.1} parent=39 // pred_check_branch
          %311 = sbr.rel (%p309) target = $region44
        $region43: #{tpu_custom_call.1} parent=39 // pred_region
          %s312 = sand.u32 %s104, 1
          %s313 = scalar_lea.sflag [#allocation3], %s312
          %s314 = sand.u32 %s104, 1
          %s315 = smul.addr %s314, 4
          %s316 = scalar_lea.vmem [#allocation2], %s315
          %317 = dma.done %s313, 64
        $region44: #{tpu_custom_call.1} parent=39 // pred_fallthru
          _
      $region40: #{tpu_custom_call.1} parent=5 // pred_fallthru
        _
    $region6: #{tpu_custom_call.1} parent=1 // loop_footer
      %s16 = sadd.s32 1, %s12
    $region7: #{tpu_custom_call.1} parent=1 // loop_footer_branch
      %11 = sbr.rel target = $region3
    $region8: #{tpu_custom_call.1} parent=1 // loop_exit
      _
    %318 = vsyncpa [#allocation3], 1
    %s319 = scalar_lea.sflag [#allocation3], 1
    %320 = vsyncpa %s319, 1

</llo_original>
